<compile_context>
chip_gen: v6e
topology: v6e:2x2x1
jax: 0.10.0
libtpu: 0.0.40
codegen_flags: <defaults>
</compile_context>

<pallas_src>
import functools

import jax
import jax.numpy as jnp
from jax.experimental import pallas as pl
from jax.experimental.pallas import tpu as pltpu

_LANE = 128     # vreg lane width: output feature dims padded to a multiple of this
_SUBLANE = 8    # sublane granularity for the batch (second-to-last) dim


def _round_up(n, m):
    return ((n + m - 1) // m) * m


def _num_tensorcores():
    """Best-effort TensorCores-per-chip count (v7x has 2, earlier gens have 1)."""
    try:
        kind = jax.devices()[0].device_kind.lower()
        return 2 if "v7" in kind else 1
    except Exception:
        return 1


def pad_params(params, compute_dtype=jnp.bfloat16):
    """One-time parameter prep (hoisted out of the forward path).

    params: list of (W, b) with W shape (in, out), b shape (1, out).

    Output feature dims are zero-padded to multiples of 128 so every matmul output
    and every store is lane-dense.  The *input* dim of the first layer is left
    unpadded so x can be consumed straight from HBM with no padded copy.  Padding is
    exact: padded weight rows see zero activations, padded columns + zero bias give
    0, and tanh(0) = 0, so padded lanes stay zero through the whole network.
    """
    dims = [params[0][0].shape[0]] + [w.shape[1] for (w, _) in params]
    pdims = [dims[0]] + [_round_up(d, _LANE) for d in dims[1:]]

    pws, pbs = [], []
    for li, (w, b) in enumerate(params):
        w_p = jnp.zeros((pdims[li], pdims[li + 1]), compute_dtype)
        w_p = w_p.at[: w.shape[0], : w.shape[1]].set(w.astype(compute_dtype))
        b_p = jnp.zeros((1, pdims[li + 1]), jnp.float32)
        b_p = b_p.at[:, : b.shape[1]].set(b.astype(jnp.float32))
        pws.append(w_p)
        pbs.append(b_p)
    return pws, pbs


def _fcnet_kernel(num_layers, compute_dtype, *refs):
    """Fused MLP kernel: one grid step = one batch tile, all layers fused on-chip.

    refs layout: [x_ref, w0, b0, w1, b1, ..., wL, bL, out_ref]
      * x is read in its original dtype and cast in-register (no padded HBM copy).
      * weights are `compute_dtype` (bf16 by default) -> MXU-native matmuls.
      * biases, accumulation and tanh stay in f32 (v5e EUP has no bf16 path).
      * tanh only on hidden layers (indices 1 .. num_layers-2), matching
        out_layer(tanh(... tanh(h1(layer_in(x))) ...)).
    """
    x_ref = refs[0]
    out_ref = refs[-1]
    param_refs = refs[1:-1]

    h = x_ref[...].astype(compute_dtype)            # (bt, in_size): in-register cast only
    for li in range(num_layers):
        w_ref = param_refs[2 * li]
        b_ref = param_refs[2 * li + 1]
        acc = jnp.dot(h, w_ref[...], preferred_element_type=jnp.float32)
        acc = acc + b_ref[...]                      # f32 bias broadcast over rows
        if 1 <= li <= num_layers - 2:
            acc = jnp.tanh(acc)                     # hidden-layer activation only
        if li < num_layers - 1:
            h = acc.astype(compute_dtype)           # back to bf16 for next MXU matmul
        else:
            out_ref[...] = acc.astype(out_ref.dtype)   # lane-dense (padded) store


def fcnet_forward(x, padded_weights, padded_biases, out_size, *,
                  batch_tile=None, num_tensorcores=None, out_dtype=None):
    """Fused FCNet forward pass with a single pallas_call.

    x:              (B, input_size), any float dtype (cast to the compute dtype in-kernel)
    padded_weights: output of pad_params (their dtype is the compute dtype)
    padded_biases:  output of pad_params (f32)
    out_size:       true (unpadded) output feature size
    out_dtype:      dtype of the kernel's HBM output (default: x.dtype; bf16 halves
                    writeback bytes at the cost of rounding the final layer).
    """
    B, in_size = x.shape
    num_layers = len(padded_weights)
    compute_dtype = padded_weights[0].dtype
    assert padded_weights[0].shape[0] == in_size, "first weight must keep unpadded input dim"
    out_pad = padded_weights[-1].shape[1]
    out_dtype = x.dtype if out_dtype is None else out_dtype

    # ---- batch tiling: one grid step per TensorCore, capped at 1024 rows/step ----
    # Single-TC chips (v5e/v6e): small batches become a single grid step (no per-step
    # overhead).  v7x: even split across the 2 TCs via dimension_semantics below.
    if batch_tile is None:
        ncores = _num_tensorcores() if num_tensorcores is None else num_tensorcores
        bp8 = _round_up(max(B, _SUBLANE), _SUBLANE)
        batch_tile = min(_round_up(pl.cdiv(bp8, ncores), _SUBLANE), 1024)
    assert batch_tile % _SUBLANE == 0, "batch_tile must be a multiple of 8"
    Bp = _round_up(max(B, batch_tile), batch_tile)

    x_in = x
    if Bp != B:
        # Only the (small) batch remainder is padded; no lane padding of x in HBM.
        x_in = jnp.zeros((Bp, in_size), x.dtype).at[:B, :].set(x)

    grid = (Bp // batch_tile,)

    in_specs = [pl.BlockSpec((batch_tile, in_size), lambda i: (i, 0))]
    flat_params = []
    for li in range(num_layers):
        flat_params.extend([padded_weights[li], padded_biases[li]])
        # Whole (padded) weight / bias every grid step: constant block index keeps
        # them VMEM-resident; they are tiny here (3 x 128x128 bf16 ~= 96 KiB).
        # TODO(synk): for very wide/deep nets add pipeline_mode=pl.Buffered(1) to
        #   single-buffer these static params (halves their VMEM footprint on v7x).
        in_specs.append(pl.BlockSpec(padded_weights[li].shape, lambda i: (0, 0)))
        in_specs.append(pl.BlockSpec(padded_biases[li].shape, lambda i: (0, 0)))

    out_spec = pl.BlockSpec((batch_tile, out_pad), lambda i: (i, 0))

    kernel = functools.partial(_fcnet_kernel, num_layers, compute_dtype)

    y_p = pl.pallas_call(
        kernel,
        out_shape=jax.ShapeDtypeStruct((Bp, out_pad), out_dtype),
        grid_spec=pltpu.PrefetchScalarGridSpec(
            num_scalar_prefetch=0,
            grid=grid,
            in_specs=in_specs,
            out_specs=out_spec,
        ),
        compiler_params=pltpu.CompilerParams(
            dimension_semantics=("parallel",),      # batch tiles independent -> both v7x TCs
            vmem_limit_bytes=32 * 1024 * 1024,
        ),
    )(x_in, *flat_params)

    # Slice away batch / lane padding (fused into the jitted caller).
    return y_p[:B, :out_size]


def init_params(key, input_size, layers, output_size):
    """Deterministic init mirroring the module's layer shapes.

    Returns list of (W, b) with W: (in, out), b: (1, out)."""
    dims = [input_size] + list(layers) + [output_size]
    params = []
    for i in range(len(dims) - 1):
        key, kw, kb = jax.random.split(key, 3)
        fan_in = dims[i]
        bound = 1.0 / jnp.sqrt(fan_in)
        w = jax.random.uniform(kw, (dims[i], dims[i + 1]), jnp.float32, -bound, bound)
        b = jax.random.uniform(kb, (1, dims[i + 1]), jnp.float32, -bound, bound)
        params.append((w, b))
    return params


def fcnet_reference(x, params, compute_dtype=jnp.float32):
    """Pure-JAX reference of the same forward pass (mirrors the compute dtype)."""
    num_layers = len(params)
    h = x.astype(compute_dtype)
    out = None
    for li, (w, b) in enumerate(params):
        acc = jnp.dot(h, w.astype(compute_dtype), preferred_element_type=jnp.float32)
        acc = acc + b.astype(jnp.float32)
        if 1 <= li <= num_layers - 2:
            acc = jnp.tanh(acc)
        h = acc.astype(compute_dtype)
        out = acc
    return out.astype(x.dtype)


if __name__ == "__main__":
    input_size = 16
    layers = [32, 32]
    output_size = 4
    batch = 256

    key = jax.random.PRNGKey(0)
    key_x, key_p = jax.random.split(key)
    x = jax.random.normal(key_x, (batch, input_size), jnp.float32)
    params = init_params(key_p, input_size, layers, output_size)

    # One-time padded-param prep (hoisted out of the per-call path); the forward
    # (pallas_call + final slice) then compiles to a single jitted dispatch.
    pws_f32, pbs_f32 = pad_params(params, jnp.float32)
    pws_bf16, pbs_bf16 = pad_params(params, jnp.bfloat16)
    fwd_f32 = jax.jit(lambda xx: fcnet_forward(xx, pws_f32, pbs_f32, output_size))
    fwd_bf16 = jax.jit(lambda xx: fcnet_forward(xx, pws_bf16, pbs_bf16, output_size))

    # --- f32 path: exact semantic check against the pure-JAX reference ---
    y_f32 = jax.block_until_ready(fwd_f32(x))
    y_ref_f32 = fcnet_reference(x, params, jnp.float32)
    assert y_f32.shape == (batch, output_size)
    assert jnp.allclose(y_f32, y_ref_f32, atol=1e-5, rtol=1e-5), \
        "Pallas f32 kernel mismatch vs reference"

    # --- bf16 path (default / performance dtype; deliberate speed/accuracy tradeoff) ---
    y_bf16 = jax.block_until_ready(fwd_bf16(x))
    y_ref_bf16 = fcnet_reference(x, params, jnp.bfloat16)
    assert y_bf16.shape == (batch, output_size)
    assert jnp.allclose(y_bf16, y_ref_bf16, atol=1e-3, rtol=1e-3), \
        "Pallas bf16 kernel mismatch vs bf16 reference"
    assert jnp.allclose(y_bf16, y_ref_f32, atol=5e-2, rtol=5e-2), \
        "Pallas bf16 kernel diverged too far from f32 reference"

    print("KERNEL_OK")
</pallas_src>

<mosaic_0001>
module attributes {stable_mosaic.version = 11 : i64} {
  func.func @_fcnet_kernel(%arg0: i32, %arg1: memref<256x16xf32, #tpu.memory_space<vmem>>, %arg2: memref<16x128xf32, #tpu.memory_space<vmem>>, %arg3: memref<1x128xf32, #tpu.memory_space<vmem>>, %arg4: memref<128x128xf32, #tpu.memory_space<vmem>>, %arg5: memref<1x128xf32, #tpu.memory_space<vmem>>, %arg6: memref<128x128xf32, #tpu.memory_space<vmem>>, %arg7: memref<1x128xf32, #tpu.memory_space<vmem>>, %arg8: memref<256x128xf32, #tpu.memory_space<vmem>>) attributes {dimension_semantics = [#tpu.dimension_semantics<parallel>], iteration_bounds = array<i64: 1>, scalar_prefetch = 0 : i64, scratch_operands = 0 : i64, tpu.core_type = #tpu.core_type<tc>, window_params = [{transform_indices = @transform_0, window_bounds = array<i64: 256, 16>}, {pipeline_mode = #tpu.pipeline_mode<synchronous>, transform_indices = @transform_1, window_bounds = array<i64: 16, 128>}, {pipeline_mode = #tpu.pipeline_mode<synchronous>, transform_indices = @transform_2, window_bounds = array<i64: 1, 128>}, {pipeline_mode = #tpu.pipeline_mode<synchronous>, transform_indices = @transform_3, window_bounds = array<i64: 128, 128>}, {pipeline_mode = #tpu.pipeline_mode<synchronous>, transform_indices = @transform_4, window_bounds = array<i64: 1, 128>}, {pipeline_mode = #tpu.pipeline_mode<synchronous>, transform_indices = @transform_5, window_bounds = array<i64: 128, 128>}, {pipeline_mode = #tpu.pipeline_mode<synchronous>, transform_indices = @transform_6, window_bounds = array<i64: 1, 128>}, {transform_indices = @transform_7, window_bounds = array<i64: 256, 128>}]} {
    %c0 = arith.constant 0 : index
    %c0_0 = arith.constant 0 : index
    %0 = vector.load %arg1[%c0, %c0_0] : memref<256x16xf32, #tpu.memory_space<vmem>>, vector<256x16xf32>
    %c0_1 = arith.constant 0 : index
    %c0_2 = arith.constant 0 : index
    %1 = vector.load %arg2[%c0_1, %c0_2] : memref<16x128xf32, #tpu.memory_space<vmem>>, vector<16x128xf32>
    %cst = arith.constant dense<0.000000e+00> : vector<256x128xf32>
    %2 = tpu.matmul %0, %1, %cst {dimension_numbers = #tpu.dot_dimension_numbers<[1], [0], [0], [1], [0, 0, 1, 1], [], []>} : vector<256x16xf32>, vector<16x128xf32>, vector<256x128xf32> -> vector<256x128xf32>
    %c0_3 = arith.constant 0 : index
    %c0_4 = arith.constant 0 : index
    %3 = vector.load %arg3[%c0_3, %c0_4] : memref<1x128xf32, #tpu.memory_space<vmem>>, vector<1x128xf32>
    %4 = vector.broadcast %3 : vector<1x128xf32> to vector<256x128xf32>
    %5 = arith.addf %2, %4 : vector<256x128xf32>
    %c0_5 = arith.constant 0 : index
    %c0_6 = arith.constant 0 : index
    %6 = vector.load %arg4[%c0_5, %c0_6] : memref<128x128xf32, #tpu.memory_space<vmem>>, vector<128x128xf32>
    %cst_7 = arith.constant dense<0.000000e+00> : vector<256x128xf32>
    %7 = tpu.matmul %5, %6, %cst_7 {dimension_numbers = #tpu.dot_dimension_numbers<[1], [0], [0], [1], [0, 0, 1, 1], [], []>} : vector<256x128xf32>, vector<128x128xf32>, vector<256x128xf32> -> vector<256x128xf32>
    %c0_8 = arith.constant 0 : index
    %c0_9 = arith.constant 0 : index
    %8 = vector.load %arg5[%c0_8, %c0_9] : memref<1x128xf32, #tpu.memory_space<vmem>>, vector<1x128xf32>
    %9 = vector.broadcast %8 : vector<1x128xf32> to vector<256x128xf32>
    %10 = arith.addf %7, %9 : vector<256x128xf32>
    %11 = math.tanh %10 : vector<256x128xf32>
    %c0_10 = arith.constant 0 : index
    %c0_11 = arith.constant 0 : index
    %12 = vector.load %arg6[%c0_10, %c0_11] : memref<128x128xf32, #tpu.memory_space<vmem>>, vector<128x128xf32>
    %cst_12 = arith.constant dense<0.000000e+00> : vector<256x128xf32>
    %13 = tpu.matmul %11, %12, %cst_12 {dimension_numbers = #tpu.dot_dimension_numbers<[1], [0], [0], [1], [0, 0, 1, 1], [], []>} : vector<256x128xf32>, vector<128x128xf32>, vector<256x128xf32> -> vector<256x128xf32>
    %c0_13 = arith.constant 0 : index
    %c0_14 = arith.constant 0 : index
    %14 = vector.load %arg7[%c0_13, %c0_14] : memref<1x128xf32, #tpu.memory_space<vmem>>, vector<1x128xf32>
    %15 = vector.broadcast %14 : vector<1x128xf32> to vector<256x128xf32>
    %16 = arith.addf %13, %15 : vector<256x128xf32>
    %c0_15 = arith.constant 0 : index
    %c0_16 = arith.constant 0 : index
    %17 = vector.load %arg8[%c0_15, %c0_16] : memref<256x128xf32, #tpu.memory_space<vmem>>, vector<256x128xf32>
    tpu.vector_store %arg8[%c0_15, %c0_16], %16 {strides = array<i32>} : memref<256x128xf32, #tpu.memory_space<vmem>>, vector<256x128xf32>,
    return
  }
  func.func @transform_0(%arg0: i32) -> (i32, i32) {
    %c0_i32 = arith.constant 0 : i32
    %c0_i32_0 = arith.constant 0 : i32
    return %arg0, %c0_i32 : i32, i32
  }
  func.func @transform_1(%arg0: i32) -> (i32, i32) {
    %c0_i32 = arith.constant 0 : i32
    %c0_i32_0 = arith.constant 0 : i32
    %c0_i32_1 = arith.constant 0 : i32
    return %c0_i32, %c0_i32_0 : i32, i32
  }
  func.func @transform_2(%arg0: i32) -> (i32, i32) {
    %c0_i32 = arith.constant 0 : i32
    %c0_i32_0 = arith.constant 0 : i32
    %c0_i32_1 = arith.constant 0 : i32
    return %c0_i32, %c0_i32_0 : i32, i32
  }
  func.func @transform_3(%arg0: i32) -> (i32, i32) {
    %c0_i32 = arith.constant 0 : i32
    %c0_i32_0 = arith.constant 0 : i32
    %c0_i32_1 = arith.constant 0 : i32
    return %c0_i32, %c0_i32_0 : i32, i32
  }
  func.func @transform_4(%arg0: i32) -> (i32, i32) {
    %c0_i32 = arith.constant 0 : i32
    %c0_i32_0 = arith.constant 0 : i32
    %c0_i32_1 = arith.constant 0 : i32
    return %c0_i32, %c0_i32_0 : i32, i32
  }
  func.func @transform_5(%arg0: i32) -> (i32, i32) {
    %c0_i32 = arith.constant 0 : i32
    %c0_i32_0 = arith.constant 0 : i32
    %c0_i32_1 = arith.constant 0 : i32
    return %c0_i32, %c0_i32_0 : i32, i32
  }
  func.func @transform_6(%arg0: i32) -> (i32, i32) {
    %c0_i32 = arith.constant 0 : i32
    %c0_i32_0 = arith.constant 0 : i32
    %c0_i32_1 = arith.constant 0 : i32
    return %c0_i32, %c0_i32_0 : i32, i32
  }
  func.func @transform_7(%arg0: i32) -> (i32, i32) {
    %c0_i32 = arith.constant 0 : i32
    %c0_i32_0 = arith.constant 0 : i32
    return %arg0, %c0_i32 : i32, i32
  }
}

</mosaic_0001>

<llo_original>
// kernel: _lambda_.1
$region0: #{_lambda_.1}
  #allocation0 [shape = 'u32[]', space=smem, size = 0x4, offset = 0x4, fixed_abs, tag = 'smem constant byte address 0x4 - core index']
  #allocation1 [shape = 'u32[144,128]{1,0:T(1,128)}', space=vmem, size = 0x12000, scoped, tag = 'internal scratch']
  %s0 = inlined_call_operand.vmem [shape: f32[256,16], index: 0, kind: input, shape index: {}]
  %s1 = inlined_call_operand.vmem [shape: f32[16,128], index: 1, kind: input, shape index: {}]
  %s2 = inlined_call_operand.vmem [shape: f32[1,128], index: 2, kind: input, shape index: {}]
  %s3 = inlined_call_operand.vmem [shape: f32[128,128], index: 3, kind: input, shape index: {}]
  %s4 = inlined_call_operand.vmem [shape: f32[1,128], index: 4, kind: input, shape index: {}]
  %s5 = inlined_call_operand.vmem [shape: f32[128,128], index: 5, kind: input, shape index: {}]
  %s6 = inlined_call_operand.vmem [shape: f32[1,128], index: 6, kind: input, shape index: {}]
  %s7 = inlined_call_operand.vmem [shape: f32[256,128], index: 7, kind: output, shape index: {}]
  %s8 = sld [smem:[#allocation0]]
  $region38: #{_lambda_.1} parent=0
    _
  %s10 = ssub.s32 1, %s8
  %s11 = scalar_select 0, %s10, %s8
  // Predicated region
  $region2: #{_lambda_.1} parent=0 // pred_check
    _
  $region3: #{_lambda_.1} parent=0 // pred_check_branch
    %13 = sbr.rel (0) target = $region5
  $region4: #{_lambda_.1} parent=0 // pred_region
    _
  $region5: #{_lambda_.1} parent=0 // pred_fallthru
    _
  // Predicated region
  $region6: #{_lambda_.1} parent=0 // pred_check
    _
  $region7: #{_lambda_.1} parent=0 // pred_check_branch
    %15 = sbr.rel (0) target = $region9
  $region8: #{_lambda_.1} parent=0 // pred_region
    _
  $region9: #{_lambda_.1} parent=0 // pred_fallthru
    _
  // Predicated region
  $region10: #{_lambda_.1} parent=0 // pred_check
    _
  $region11: #{_lambda_.1} parent=0 // pred_check_branch
    %17 = sbr.rel (0) target = $region13
  $region12: #{_lambda_.1} parent=0 // pred_region
    _
  $region13: #{_lambda_.1} parent=0 // pred_fallthru
    _
  // Predicated region
  $region14: #{_lambda_.1} parent=0 // pred_check
    _
  $region15: #{_lambda_.1} parent=0 // pred_check_branch
    %19 = sbr.rel (0) target = $region17
  $region16: #{_lambda_.1} parent=0 // pred_region
    _
  $region17: #{_lambda_.1} parent=0 // pred_fallthru
    _
  // Predicated region
  $region18: #{_lambda_.1} parent=0 // pred_check
    _
  $region19: #{_lambda_.1} parent=0 // pred_check_branch
    %21 = sbr.rel (0) target = $region21
  $region20: #{_lambda_.1} parent=0 // pred_region
    _
  $region21: #{_lambda_.1} parent=0 // pred_fallthru
    _
  // Predicated region
  $region22: #{_lambda_.1} parent=0 // pred_check
    _
  $region23: #{_lambda_.1} parent=0 // pred_check_branch
    %23 = sbr.rel (0) target = $region25
  $region24: #{_lambda_.1} parent=0 // pred_region
    _
  $region25: #{_lambda_.1} parent=0 // pred_fallthru
    _
  // Predicated region
  $region26: #{_lambda_.1} parent=0 // pred_check
    _
  $region27: #{_lambda_.1} parent=0 // pred_check_branch
    %25 = sbr.rel (0) target = $region29
  $region28: #{_lambda_.1} parent=0 // pred_region
    _
  $region29: #{_lambda_.1} parent=0 // pred_fallthru
    _
  %v26 = vld [vmem:[%s0] sm:$0xff]
  %v27 = vld [vmem:[%s0 + $0x8] sm:$0xff]
  %v28 = vld [vmem:[%s0 + $0x10] sm:$0xff]
  %v29 = vld [vmem:[%s0 + $0x18] sm:$0xff]
  %v30 = vld [vmem:[%s0 + $0x20] sm:$0xff]
  %v31 = vld [vmem:[%s0 + $0x28] sm:$0xff]
  %v32 = vld [vmem:[%s0 + $0x30] sm:$0xff]
  %v33 = vld [vmem:[%s0 + $0x38] sm:$0xff]
  %v34 = vld [vmem:[%s0 + $0x40] sm:$0xff]
  %v35 = vld [vmem:[%s0 + $0x48] sm:$0xff]
  %v36 = vld [vmem:[%s0 + $0x50] sm:$0xff]
  %v37 = vld [vmem:[%s0 + $0x58] sm:$0xff]
  %v38 = vld [vmem:[%s0 + $0x60] sm:$0xff]
  %v39 = vld [vmem:[%s0 + $0x68] sm:$0xff]
  %v40 = vld [vmem:[%s0 + $0x70] sm:$0xff]
  %v41 = vld [vmem:[%s0 + $0x78] sm:$0xff]
  %v42 = vld [vmem:[%s0 + $0x80] sm:$0xff]
  %v43 = vld [vmem:[%s0 + $0x88] sm:$0xff]
  %v44 = vld [vmem:[%s0 + $0x90] sm:$0xff]
  %v45 = vld [vmem:[%s0 + $0x98] sm:$0xff]
  %v46 = vld [vmem:[%s0 + $0xa0] sm:$0xff]
  %v47 = vld [vmem:[%s0 + $0xa8] sm:$0xff]
  %v48 = vld [vmem:[%s0 + $0xb0] sm:$0xff]
  %v49 = vld [vmem:[%s0 + $0xb8] sm:$0xff]
  %v50 = vld [vmem:[%s0 + $0xc0] sm:$0xff]
  %v51 = vld [vmem:[%s0 + $0xc8] sm:$0xff]
  %v52 = vld [vmem:[%s0 + $0xd0] sm:$0xff]
  %v53 = vld [vmem:[%s0 + $0xd8] sm:$0xff]
  %v54 = vld [vmem:[%s0 + $0xe0] sm:$0xff]
  %v55 = vld [vmem:[%s0 + $0xe8] sm:$0xff]
  %v56 = vld [vmem:[%s0 + $0xf0] sm:$0xff]
  %v57 = vld [vmem:[%s0 + $0xf8] sm:$0xff]
  %v58 = vld [vmem:[%s1] sm:$0xff]
  %v59 = vld [vmem:[%s1 + $0x8] sm:$0xff]
  %v60 = vld [vmem:[%s2] sm:$0x1]
  %v62 = vlaneseq
  %v63 = vshrl.u32 %v62, 7
  %v64 = vsub.s32 0, %v63
  %v65 = vrot.slane %v60, %v64
  %vm67 = vcmask 130048
  %v69 = vsel %vm67, %v26, 0
  %v72 = vsel %vm67, %v27, 0
  %v75 = vsel %vm67, %v28, 0
  %v78 = vsel %vm67, %v29, 0
  %v81 = vsel %vm67, %v30, 0
  %v84 = vsel %vm67, %v31, 0
  %v87 = vsel %vm67, %v32, 0
  %v90 = vsel %vm67, %v33, 0
  %v93 = vsel %vm67, %v34, 0
  %v96 = vsel %vm67, %v35, 0
  %v99 = vsel %vm67, %v36, 0
  %v102 = vsel %vm67, %v37, 0
  %v105 = vsel %vm67, %v38, 0
  %v108 = vsel %vm67, %v39, 0
  %v111 = vsel %vm67, %v40, 0
  %v114 = vsel %vm67, %v41, 0
  %v117 = vsel %vm67, %v42, 0
  %v120 = vsel %vm67, %v43, 0
  %v123 = vsel %vm67, %v44, 0
  %v126 = vsel %vm67, %v45, 0
  %v129 = vsel %vm67, %v46, 0
  %v132 = vsel %vm67, %v47, 0
  %v135 = vsel %vm67, %v48, 0
  %v138 = vsel %vm67, %v49, 0
  %v141 = vsel %vm67, %v50, 0
  %v144 = vsel %vm67, %v51, 0
  %v147 = vsel %vm67, %v52, 0
  %v150 = vsel %vm67, %v53, 0
  %v153 = vsel %vm67, %v54, 0
  %v156 = vsel %vm67, %v55, 0
  %v159 = vsel %vm67, %v56, 0
  %v162 = vsel %vm67, %v57, 0
  %164 = vmatprep.subr.mxu0 0.0
  %165 = vmatpush1.msra.mxu0 0.0
  %166 = vmatprep.subr.mxu0 0.0
  %167 = vmatpush1.msra.mxu0 0.0
  %168 = vmatprep.subr.mxu0 0.0
  %169 = vmatpush1.msra.mxu0 0.0
  %170 = vmatprep.subr.mxu0 0.0
  %171 = vmatpush1.msra.mxu0 0.0
  %172 = vmatprep.subr.mxu0 0.0
  %173 = vmatpush1.msra.mxu0 0.0
  %174 = vmatprep.subr.mxu0 0.0
  %175 = vmatpush1.msra.mxu0 0.0
  %176 = vmatprep.subr.mxu0 0.0
  %177 = vmatpush1.msra.mxu0 0.0
  %178 = vmatprep.subr.mxu0 0.0
  %179 = vmatpush1.msra.mxu0 0.0
  %180 = vmatprep.subr.mxu0 0.0
  %181 = vmatpush1.msra.mxu0 0.0
  %182 = vmatprep.subr.mxu0 0.0
  %183 = vmatpush1.msra.mxu0 0.0
  %184 = vmatprep.subr.mxu0 0.0
  %185 = vmatpush1.msra.mxu0 0.0
  %186 = vmatprep.subr.mxu0 0.0
  %187 = vmatpush1.msra.mxu0 0.0
  %188 = vmatprep.subr.mxu0 0.0
  %189 = vmatpush1.msra.mxu0 0.0
  %190 = vmatprep.subr.mxu0 0.0
  %191 = vmatpush1.msra.mxu0 0.0
  %192 = vmatprep.subr.mxu0 0.0
  %193 = vmatpush1.msra.mxu0 %v59
  %194 = vmatprep.subr.mxu0 0.0
  %195 = vmatpush1.msra.mxu0 %v58
  %196 = vmatprep.subr.mxu0 0.0
  %197 = vmatpush2.msra.mxu0 0.0
  %198 = vmatprep.subr.mxu0 0.0
  %199 = vmatpush2.msra.mxu0 0.0
  %200 = vmatprep.subr.mxu0 0.0
  %201 = vmatpush2.msra.mxu0 0.0
  %202 = vmatprep.subr.mxu0 0.0
  %203 = vmatpush2.msra.mxu0 0.0
  %204 = vmatprep.subr.mxu0 0.0
  %205 = vmatpush2.msra.mxu0 0.0
  %206 = vmatprep.subr.mxu0 0.0
  %207 = vmatpush2.msra.mxu0 0.0
  %208 = vmatprep.subr.mxu0 0.0
  %209 = vmatpush2.msra.mxu0 0.0
  %210 = vmatprep.subr.mxu0 0.0
  %211 = vmatpush2.msra.mxu0 0.0
  %212 = vmatprep.subr.mxu0 0.0
  %213 = vmatpush2.msra.mxu0 0.0
  %214 = vmatprep.subr.mxu0 0.0
  %215 = vmatpush2.msra.mxu0 0.0
  %216 = vmatprep.subr.mxu0 0.0
  %217 = vmatpush2.msra.mxu0 0.0
  %218 = vmatprep.subr.mxu0 0.0
  %219 = vmatpush2.msra.mxu0 0.0
  %220 = vmatprep.subr.mxu0 0.0
  %221 = vmatpush2.msra.mxu0 0.0
  %222 = vmatprep.subr.mxu0 0.0
  %223 = vmatpush2.msra.mxu0 0.0
  %224 = vmatprep.subr.mxu0 0.0
  %225 = vmatpush2.msra.mxu0 0.0
  %226 = vmatprep.subr.mxu0 0.0
  %227 = vmatpush2.msra.mxu0 0.0
  %228 = vmatprep.mubr.f32.mxu0 0.0
  %229 = vmatmul.mubr.f32.gmra.mxu0 %v69
  %v230 = vpop.f32.mrf.mxu0
  %v231 = vadd.f32 %v65, %v230
  %v232 = vpop.f32.mrf.mxu0
  %233 = vmatprep.mubr.f32.mxu0 0.0
  %234 = vmatmul.mubr.f32.gmra.mxu0 %v72
  %v235 = vpop.f32.mrf.mxu0
  %v236 = vadd.f32 %v65, %v235
  %v237 = vpop.f32.mrf.mxu0
  %238 = vmatprep.mubr.f32.mxu0 0.0
  %239 = vmatmul.mubr.f32.gmra.mxu0 %v75
  %v240 = vpop.f32.mrf.mxu0
  %v241 = vadd.f32 %v65, %v240
  %v242 = vpop.f32.mrf.mxu0
  %243 = vmatprep.mubr.f32.mxu0 0.0
  %244 = vmatmul.mubr.f32.gmra.mxu0 %v78
  %v245 = vpop.f32.mrf.mxu0
  %v246 = vadd.f32 %v65, %v245
  %v247 = vpop.f32.mrf.mxu0
  %248 = vmatprep.mubr.f32.mxu0 0.0
  %249 = vmatmul.mubr.f32.gmra.mxu0 %v81
  %v250 = vpop.f32.mrf.mxu0
  %v251 = vadd.f32 %v65, %v250
  %v252 = vpop.f32.mrf.mxu0
  %253 = vmatprep.mubr.f32.mxu0 0.0
  %254 = vmatmul.mubr.f32.gmra.mxu0 %v84
  %v255 = vpop.f32.mrf.mxu0
  %v256 = vadd.f32 %v65, %v255
  %v257 = vpop.f32.mrf.mxu0
  %258 = vmatprep.mubr.f32.mxu0 0.0
  %259 = vmatmul.mubr.f32.gmra.mxu0 %v87
  %v260 = vpop.f32.mrf.mxu0
  %v261 = vadd.f32 %v65, %v260
  %v262 = vpop.f32.mrf.mxu0
  %263 = vmatprep.mubr.f32.mxu0 0.0
  %264 = vmatmul.mubr.f32.gmra.mxu0 %v90
  %v265 = vpop.f32.mrf.mxu0
  %v266 = vadd.f32 %v65, %v265
  %v267 = vpop.f32.mrf.mxu0
  %268 = vmatprep.mubr.f32.mxu0 0.0
  %269 = vmatmul.mubr.f32.gmra.mxu0 %v93
  %v270 = vpop.f32.mrf.mxu0
  %v271 = vadd.f32 %v65, %v270
  %v272 = vpop.f32.mrf.mxu0
  %273 = vmatprep.mubr.f32.mxu0 0.0
  %274 = vmatmul.mubr.f32.gmra.mxu0 %v96
  %v275 = vpop.f32.mrf.mxu0
  %v276 = vadd.f32 %v65, %v275
  %v277 = vpop.f32.mrf.mxu0
  %278 = vmatprep.mubr.f32.mxu0 0.0
  %279 = vmatmul.mubr.f32.gmra.mxu0 %v99
  %v280 = vpop.f32.mrf.mxu0
  %v281 = vadd.f32 %v65, %v280
  %v282 = vpop.f32.mrf.mxu0
  %283 = vmatprep.mubr.f32.mxu0 0.0
  %284 = vmatmul.mubr.f32.gmra.mxu0 %v102
  %v285 = vpop.f32.mrf.mxu0
  %v286 = vadd.f32 %v65, %v285
  %v287 = vpop.f32.mrf.mxu0
  %288 = vmatprep.mubr.f32.mxu0 0.0
  %289 = vmatmul.mubr.f32.gmra.mxu0 %v105
  %v290 = vpop.f32.mrf.mxu0
  %v291 = vadd.f32 %v65, %v290
  %v292 = vpop.f32.mrf.mxu0
  %293 = vmatprep.mubr.f32.mxu0 0.0
  %294 = vmatmul.mubr.f32.gmra.mxu0 %v108
  %v295 = vpop.f32.mrf.mxu0
  %v296 = vadd.f32 %v65, %v295
  %v297 = vpop.f32.mrf.mxu0
  %298 = vmatprep.mubr.f32.mxu0 0.0
  %299 = vmatmul.mubr.f32.gmra.mxu0 %v111
  %v300 = vpop.f32.mrf.mxu0
  %v301 = vadd.f32 %v65, %v300
  %v302 = vpop.f32.mrf.mxu0
  %303 = vmatprep.mubr.f32.mxu0 0.0
  %304 = vmatmul.mubr.f32.gmra.mxu0 %v114
  %v305 = vpop.f32.mrf.mxu0
  %v306 = vadd.f32 %v65, %v305
  %v307 = vpop.f32.mrf.mxu0
  %308 = vmatprep.mubr.f32.mxu0 0.0
  %309 = vmatmul.mubr.f32.gmra.mxu0 %v117
  %v310 = vpop.f32.mrf.mxu0
  %v311 = vadd.f32 %v65, %v310
  %v312 = vpop.f32.mrf.mxu0
  %313 = vmatprep.mubr.f32.mxu0 0.0
  %314 = vmatmul.mubr.f32.gmra.mxu0 %v120
  %v315 = vpop.f32.mrf.mxu0
  %v316 = vadd.f32 %v65, %v315
  %v317 = vpop.f32.mrf.mxu0
  %318 = vmatprep.mubr.f32.mxu0 0.0
  %319 = vmatmul.mubr.f32.gmra.mxu0 %v123
  %v320 = vpop.f32.mrf.mxu0
  %v321 = vadd.f32 %v65, %v320
  %v322 = vpop.f32.mrf.mxu0
  %323 = vmatprep.mubr.f32.mxu0 0.0
  %324 = vmatmul.mubr.f32.gmra.mxu0 %v126
  %v325 = vpop.f32.mrf.mxu0
  %v326 = vadd.f32 %v65, %v325
  %v327 = vpop.f32.mrf.mxu0
  %328 = vmatprep.mubr.f32.mxu0 0.0
  %329 = vmatmul.mubr.f32.gmra.mxu0 %v129
  %v330 = vpop.f32.mrf.mxu0
  %v331 = vadd.f32 %v65, %v330
  %v332 = vpop.f32.mrf.mxu0
  %333 = vmatprep.mubr.f32.mxu0 0.0
  %334 = vmatmul.mubr.f32.gmra.mxu0 %v132
  %v335 = vpop.f32.mrf.mxu0
  %v336 = vadd.f32 %v65, %v335
  %v337 = vpop.f32.mrf.mxu0
  %338 = vmatprep.mubr.f32.mxu0 0.0
  %339 = vmatmul.mubr.f32.gmra.mxu0 %v135
  %v340 = vpop.f32.mrf.mxu0
  %v341 = vadd.f32 %v65, %v340
  %v342 = vpop.f32.mrf.mxu0
  %343 = vmatprep.mubr.f32.mxu0 0.0
  %344 = vmatmul.mubr.f32.gmra.mxu0 %v138
  %v345 = vpop.f32.mrf.mxu0
  %v346 = vadd.f32 %v65, %v345
  %v347 = vpop.f32.mrf.mxu0
  %348 = vmatprep.mubr.f32.mxu0 0.0
  %349 = vmatmul.mubr.f32.gmra.mxu0 %v141
  %v350 = vpop.f32.mrf.mxu0
  %v351 = vadd.f32 %v65, %v350
  %v352 = vpop.f32.mrf.mxu0
  %353 = vmatprep.mubr.f32.mxu0 0.0
  %354 = vmatmul.mubr.f32.gmra.mxu0 %v144
  %v355 = vpop.f32.mrf.mxu0
  %v356 = vadd.f32 %v65, %v355
  %v357 = vpop.f32.mrf.mxu0
  %358 = vmatprep.mubr.f32.mxu0 0.0
  %359 = vmatmul.mubr.f32.gmra.mxu0 %v147
  %v360 = vpop.f32.mrf.mxu0
  %v361 = vadd.f32 %v65, %v360
  %v362 = vpop.f32.mrf.mxu0
  %363 = vmatprep.mubr.f32.mxu0 0.0
  %364 = vmatmul.mubr.f32.gmra.mxu0 %v150
  %v365 = vpop.f32.mrf.mxu0
  %v366 = vadd.f32 %v65, %v365
  %v367 = vpop.f32.mrf.mxu0
  %368 = vmatprep.mubr.f32.mxu0 0.0
  %369 = vmatmul.mubr.f32.gmra.mxu0 %v153
  %v370 = vpop.f32.mrf.mxu0
  %v371 = vadd.f32 %v65, %v370
  %v372 = vpop.f32.mrf.mxu0
  %373 = vmatprep.mubr.f32.mxu0 0.0
  %374 = vmatmul.mubr.f32.gmra.mxu0 %v156
  %v375 = vpop.f32.mrf.mxu0
  %v376 = vadd.f32 %v65, %v375
  %v377 = vpop.f32.mrf.mxu0
  %378 = vmatprep.mubr.f32.mxu0 0.0
  %379 = vmatmul.mubr.f32.gmra.mxu0 %v159
  %v380 = vpop.f32.mrf.mxu0
  %v381 = vadd.f32 %v65, %v380
  %v382 = vpop.f32.mrf.mxu0
  %383 = vmatprep.mubr.f32.mxu0 0.0
  %384 = vmatmul.mubr.f32.gmra.mxu0 %v162
  %v385 = vpop.f32.mrf.mxu0
  %v386 = vadd.f32 %v65, %v385
  %v387 = vpop.f32.mrf.mxu0
  %388 = vdwg.mxu0
  %v389 = vld [vmem:[%s3] sm:$0xff]
  %v390 = vld [vmem:[%s3 + $0x8] sm:$0xff]
  %v391 = vld [vmem:[%s3 + $0x10] sm:$0xff]
  %v392 = vld [vmem:[%s3 + $0x18] sm:$0xff]
  %v393 = vld [vmem:[%s3 + $0x20] sm:$0xff]
  %v394 = vld [vmem:[%s3 + $0x28] sm:$0xff]
  %v395 = vld [vmem:[%s3 + $0x30] sm:$0xff]
  %v396 = vld [vmem:[%s3 + $0x38] sm:$0xff]
  %v397 = vld [vmem:[%s3 + $0x40] sm:$0xff]
  %v398 = vld [vmem:[%s3 + $0x48] sm:$0xff]
  %v399 = vld [vmem:[%s3 + $0x50] sm:$0xff]
  %v400 = vld [vmem:[%s3 + $0x58] sm:$0xff]
  %v401 = vld [vmem:[%s3 + $0x60] sm:$0xff]
  %v402 = vld [vmem:[%s3 + $0x68] sm:$0xff]
  %v403 = vld [vmem:[%s3 + $0x70] sm:$0xff]
  %v404 = vld [vmem:[%s3 + $0x78] sm:$0xff]
  %v405 = vld [vmem:[%s4] sm:$0x1]
  %v407 = vlaneseq
  %v408 = vshrl.u32 %v407, 7
  %v409 = vsub.s32 0, %v408
  %v410 = vrot.slane %v405, %v409
  %412 = vmatprep.subr.mxu0 0.0
  %413 = vmatpush1.msra.mxu0 %v404
  %414 = vmatprep.subr.mxu0 0.0
  %415 = vmatpush1.msra.mxu0 %v403
  %416 = vmatprep.subr.mxu0 0.0
  %417 = vmatpush1.msra.mxu0 %v402
  %418 = vmatprep.subr.mxu0 0.0
  %419 = vmatpush1.msra.mxu0 %v401
  %420 = vmatprep.subr.mxu0 0.0
  %421 = vmatpush1.msra.mxu0 %v400
  %422 = vmatprep.subr.mxu0 0.0
  %423 = vmatpush1.msra.mxu0 %v399
  %424 = vmatprep.subr.mxu0 0.0
  %425 = vmatpush1.msra.mxu0 %v398
  %426 = vmatprep.subr.mxu0 0.0
  %427 = vmatpush1.msra.mxu0 %v397
  %428 = vmatprep.subr.mxu0 0.0
  %429 = vmatpush1.msra.mxu0 %v396
  %430 = vmatprep.subr.mxu0 0.0
  %431 = vmatpush1.msra.mxu0 %v395
  %432 = vmatprep.subr.mxu0 0.0
  %433 = vmatpush1.msra.mxu0 %v394
  %434 = vmatprep.subr.mxu0 0.0
  %435 = vmatpush1.msra.mxu0 %v393
  %436 = vmatprep.subr.mxu0 0.0
  %437 = vmatpush1.msra.mxu0 %v392
  %438 = vmatprep.subr.mxu0 0.0
  %439 = vmatpush1.msra.mxu0 %v391
  %440 = vmatprep.subr.mxu0 0.0
  %441 = vmatpush1.msra.mxu0 %v390
  %442 = vmatprep.subr.mxu0 0.0
  %443 = vmatpush1.msra.mxu0 %v389
  %444 = vmatprep.subr.mxu0 0.0
  %445 = vmatpush2.msra.mxu0 0.0
  %446 = vmatprep.subr.mxu0 0.0
  %447 = vmatpush2.msra.mxu0 0.0
  %448 = vmatprep.subr.mxu0 0.0
  %449 = vmatpush2.msra.mxu0 0.0
  %450 = vmatprep.subr.mxu0 0.0
  %451 = vmatpush2.msra.mxu0 0.0
  %452 = vmatprep.subr.mxu0 0.0
  %453 = vmatpush2.msra.mxu0 0.0
  %454 = vmatprep.subr.mxu0 0.0
  %455 = vmatpush2.msra.mxu0 0.0
  %456 = vmatprep.subr.mxu0 0.0
  %457 = vmatpush2.msra.mxu0 0.0
  %458 = vmatprep.subr.mxu0 0.0
  %459 = vmatpush2.msra.mxu0 0.0
  %460 = vmatprep.subr.mxu0 0.0
  %461 = vmatpush2.msra.mxu0 0.0
  %462 = vmatprep.subr.mxu0 0.0
  %463 = vmatpush2.msra.mxu0 0.0
  %464 = vmatprep.subr.mxu0 0.0
  %465 = vmatpush2.msra.mxu0 0.0
  %466 = vmatprep.subr.mxu0 0.0
  %467 = vmatpush2.msra.mxu0 0.0
  %468 = vmatprep.subr.mxu0 0.0
  %469 = vmatpush2.msra.mxu0 0.0
  %470 = vmatprep.subr.mxu0 0.0
  %471 = vmatpush2.msra.mxu0 0.0
  %472 = vmatprep.subr.mxu0 0.0
  %473 = vmatpush2.msra.mxu0 0.0
  %474 = vmatprep.subr.mxu0 0.0
  %475 = vmatpush2.msra.mxu0 0.0
  %476 = vmatprep.mubr.f32.mxu0 0.0
  %477 = vmatmul.mubr.f32.gmra.mxu0 %v231
  %v478 = vpop.f32.mrf.mxu0
  %v479 = vadd.f32 %v410, %v478
  %v480 = vpop.f32.mrf.mxu0
  %481 = vmatprep.mubr.f32.mxu0 0.0
  %482 = vmatmul.mubr.f32.gmra.mxu0 %v236
  %v483 = vpop.f32.mrf.mxu0
  %v484 = vadd.f32 %v410, %v483
  %v485 = vpop.f32.mrf.mxu0
  %486 = vmatprep.mubr.f32.mxu0 0.0
  %487 = vmatmul.mubr.f32.gmra.mxu0 %v241
  %v488 = vpop.f32.mrf.mxu0
  %v489 = vadd.f32 %v410, %v488
  %v490 = vpop.f32.mrf.mxu0
  %491 = vmatprep.mubr.f32.mxu0 0.0
  %492 = vmatmul.mubr.f32.gmra.mxu0 %v246
  %v493 = vpop.f32.mrf.mxu0
  %v494 = vadd.f32 %v410, %v493
  %v495 = vpop.f32.mrf.mxu0
  %496 = vmatprep.mubr.f32.mxu0 0.0
  %497 = vmatmul.mubr.f32.gmra.mxu0 %v251
  %v498 = vpop.f32.mrf.mxu0
  %v499 = vadd.f32 %v410, %v498
  %v500 = vpop.f32.mrf.mxu0
  %501 = vmatprep.mubr.f32.mxu0 0.0
  %502 = vmatmul.mubr.f32.gmra.mxu0 %v256
  %v503 = vpop.f32.mrf.mxu0
  %v504 = vadd.f32 %v410, %v503
  %v505 = vpop.f32.mrf.mxu0
  %506 = vmatprep.mubr.f32.mxu0 0.0
  %507 = vmatmul.mubr.f32.gmra.mxu0 %v261
  %v508 = vpop.f32.mrf.mxu0
  %v509 = vadd.f32 %v410, %v508
  %v510 = vpop.f32.mrf.mxu0
  %511 = vmatprep.mubr.f32.mxu0 0.0
  %512 = vmatmul.mubr.f32.gmra.mxu0 %v266
  %v513 = vpop.f32.mrf.mxu0
  %v514 = vadd.f32 %v410, %v513
  %v515 = vpop.f32.mrf.mxu0
  %516 = vmatprep.mubr.f32.mxu0 0.0
  %517 = vmatmul.mubr.f32.gmra.mxu0 %v271
  %v518 = vpop.f32.mrf.mxu0
  %v519 = vadd.f32 %v410, %v518
  %v520 = vpop.f32.mrf.mxu0
  %521 = vmatprep.mubr.f32.mxu0 0.0
  %522 = vmatmul.mubr.f32.gmra.mxu0 %v276
  %v523 = vpop.f32.mrf.mxu0
  %v524 = vadd.f32 %v410, %v523
  %v525 = vpop.f32.mrf.mxu0
  %526 = vmatprep.mubr.f32.mxu0 0.0
  %527 = vmatmul.mubr.f32.gmra.mxu0 %v281
  %v528 = vpop.f32.mrf.mxu0
  %v529 = vadd.f32 %v410, %v528
  %v530 = vpop.f32.mrf.mxu0
  %531 = vmatprep.mubr.f32.mxu0 0.0
  %532 = vmatmul.mubr.f32.gmra.mxu0 %v286
  %v533 = vpop.f32.mrf.mxu0
  %v534 = vadd.f32 %v410, %v533
  %v535 = vpop.f32.mrf.mxu0
  %536 = vmatprep.mubr.f32.mxu0 0.0
  %537 = vmatmul.mubr.f32.gmra.mxu0 %v291
  %v538 = vpop.f32.mrf.mxu0
  %v539 = vadd.f32 %v410, %v538
  %v540 = vpop.f32.mrf.mxu0
  %541 = vmatprep.mubr.f32.mxu0 0.0
  %542 = vmatmul.mubr.f32.gmra.mxu0 %v296
  %v543 = vpop.f32.mrf.mxu0
  %v544 = vadd.f32 %v410, %v543
  %v545 = vpop.f32.mrf.mxu0
  %546 = vmatprep.mubr.f32.mxu0 0.0
  %547 = vmatmul.mubr.f32.gmra.mxu0 %v301
  %v548 = vpop.f32.mrf.mxu0
  %v549 = vadd.f32 %v410, %v548
  %v550 = vpop.f32.mrf.mxu0
  %551 = vmatprep.mubr.f32.mxu0 0.0
  %552 = vmatmul.mubr.f32.gmra.mxu0 %v306
  %v553 = vpop.f32.mrf.mxu0
  %v554 = vadd.f32 %v410, %v553
  %v555 = vpop.f32.mrf.mxu0
  %556 = vmatprep.mubr.f32.mxu0 0.0
  %557 = vmatmul.mubr.f32.gmra.mxu0 %v311
  %v558 = vpop.f32.mrf.mxu0
  %v559 = vadd.f32 %v410, %v558
  %v560 = vpop.f32.mrf.mxu0
  %561 = vmatprep.mubr.f32.mxu0 0.0
  %562 = vmatmul.mubr.f32.gmra.mxu0 %v316
  %v563 = vpop.f32.mrf.mxu0
  %v564 = vadd.f32 %v410, %v563
  %v565 = vpop.f32.mrf.mxu0
  %566 = vmatprep.mubr.f32.mxu0 0.0
  %567 = vmatmul.mubr.f32.gmra.mxu0 %v321
  %v568 = vpop.f32.mrf.mxu0
  %v569 = vadd.f32 %v410, %v568
  %v570 = vpop.f32.mrf.mxu0
  %571 = vmatprep.mubr.f32.mxu0 0.0
  %572 = vmatmul.mubr.f32.gmra.mxu0 %v326
  %v573 = vpop.f32.mrf.mxu0
  %v574 = vadd.f32 %v410, %v573
  %v575 = vpop.f32.mrf.mxu0
  %576 = vmatprep.mubr.f32.mxu0 0.0
  %577 = vmatmul.mubr.f32.gmra.mxu0 %v331
  %v578 = vpop.f32.mrf.mxu0
  %v579 = vadd.f32 %v410, %v578
  %v580 = vpop.f32.mrf.mxu0
  %581 = vmatprep.mubr.f32.mxu0 0.0
  %582 = vmatmul.mubr.f32.gmra.mxu0 %v336
  %v583 = vpop.f32.mrf.mxu0
  %v584 = vadd.f32 %v410, %v583
  %v585 = vpop.f32.mrf.mxu0
  %586 = vmatprep.mubr.f32.mxu0 0.0
  %587 = vmatmul.mubr.f32.gmra.mxu0 %v341
  %v588 = vpop.f32.mrf.mxu0
  %v589 = vadd.f32 %v410, %v588
  %v590 = vpop.f32.mrf.mxu0
  %591 = vmatprep.mubr.f32.mxu0 0.0
  %592 = vmatmul.mubr.f32.gmra.mxu0 %v346
  %v593 = vpop.f32.mrf.mxu0
  %v594 = vadd.f32 %v410, %v593
  %v595 = vpop.f32.mrf.mxu0
  %596 = vmatprep.mubr.f32.mxu0 0.0
  %597 = vmatmul.mubr.f32.gmra.mxu0 %v351
  %v598 = vpop.f32.mrf.mxu0
  %v599 = vadd.f32 %v410, %v598
  %v600 = vpop.f32.mrf.mxu0
  %601 = vmatprep.mubr.f32.mxu0 0.0
  %602 = vmatmul.mubr.f32.gmra.mxu0 %v356
  %v603 = vpop.f32.mrf.mxu0
  %v604 = vadd.f32 %v410, %v603
  %v605 = vpop.f32.mrf.mxu0
  %606 = vmatprep.mubr.f32.mxu0 0.0
  %607 = vmatmul.mubr.f32.gmra.mxu0 %v361
  %v608 = vpop.f32.mrf.mxu0
  %v609 = vadd.f32 %v410, %v608
  %v610 = vpop.f32.mrf.mxu0
  %611 = vmatprep.mubr.f32.mxu0 0.0
  %612 = vmatmul.mubr.f32.gmra.mxu0 %v366
  %v613 = vpop.f32.mrf.mxu0
  %v614 = vadd.f32 %v410, %v613
  %v615 = vpop.f32.mrf.mxu0
  %616 = vmatprep.mubr.f32.mxu0 0.0
  %617 = vmatmul.mubr.f32.gmra.mxu0 %v371
  %v618 = vpop.f32.mrf.mxu0
  %v619 = vadd.f32 %v410, %v618
  %v620 = vpop.f32.mrf.mxu0
  %621 = vmatprep.mubr.f32.mxu0 0.0
  %622 = vmatmul.mubr.f32.gmra.mxu0 %v376
  %v623 = vpop.f32.mrf.mxu0
  %v624 = vadd.f32 %v410, %v623
  %v625 = vpop.f32.mrf.mxu0
  %626 = vmatprep.mubr.f32.mxu0 0.0
  %627 = vmatmul.mubr.f32.gmra.mxu0 %v381
  %v628 = vpop.f32.mrf.mxu0
  %v629 = vadd.f32 %v410, %v628
  %v630 = vpop.f32.mrf.mxu0
  %631 = vmatprep.mubr.f32.mxu0 0.0
  %632 = vmatmul.mubr.f32.gmra.mxu0 %v386
  %v633 = vpop.f32.mrf.mxu0
  %v634 = vadd.f32 %v410, %v633
  %v635 = vpop.f32.mrf.mxu0
  %636 = vdwg.mxu0
  %v637 = vtanh.pop %v479
  %v638 = vtanh.pop %v484
  %v639 = vtanh.pop %v489
  %v640 = vtanh.pop %v494
  %v641 = vtanh.pop %v499
  %v642 = vtanh.pop %v504
  %v643 = vtanh.pop %v509
  %v644 = vtanh.pop %v514
  %v645 = vtanh.pop %v519
  %v646 = vtanh.pop %v524
  %v647 = vtanh.pop %v529
  %v648 = vtanh.pop %v534
  %v649 = vtanh.pop %v539
  %v650 = vtanh.pop %v544
  %v651 = vtanh.pop %v549
  %v652 = vtanh.pop %v554
  %v653 = vtanh.pop %v559
  %v654 = vtanh.pop %v564
  %v655 = vtanh.pop %v569
  %v656 = vtanh.pop %v574
  %v657 = vtanh.pop %v579
  %v658 = vtanh.pop %v584
  %v659 = vtanh.pop %v589
  %v660 = vtanh.pop %v594
  %v661 = vtanh.pop %v599
  %v662 = vtanh.pop %v604
  %v663 = vtanh.pop %v609
  %v664 = vtanh.pop %v614
  %v665 = vtanh.pop %v619
  %v666 = vtanh.pop %v624
  %v667 = vtanh.pop %v629
  %v668 = vtanh.pop %v634
  %v669 = vld [vmem:[%s5] sm:$0xff]
  %v670 = vld [vmem:[%s5 + $0x8] sm:$0xff]
  %v671 = vld [vmem:[%s5 + $0x10] sm:$0xff]
  %v672 = vld [vmem:[%s5 + $0x18] sm:$0xff]
  %v673 = vld [vmem:[%s5 + $0x20] sm:$0xff]
  %v674 = vld [vmem:[%s5 + $0x28] sm:$0xff]
  %v675 = vld [vmem:[%s5 + $0x30] sm:$0xff]
  %v676 = vld [vmem:[%s5 + $0x38] sm:$0xff]
  %v677 = vld [vmem:[%s5 + $0x40] sm:$0xff]
  %v678 = vld [vmem:[%s5 + $0x48] sm:$0xff]
  %v679 = vld [vmem:[%s5 + $0x50] sm:$0xff]
  %v680 = vld [vmem:[%s5 + $0x58] sm:$0xff]
  %v681 = vld [vmem:[%s5 + $0x60] sm:$0xff]
  %v682 = vld [vmem:[%s5 + $0x68] sm:$0xff]
  %v683 = vld [vmem:[%s5 + $0x70] sm:$0xff]
  %v684 = vld [vmem:[%s5 + $0x78] sm:$0xff]
  %v685 = vld [vmem:[%s6] sm:$0x1]
  %v687 = vlaneseq
  %v688 = vshrl.u32 %v687, 7
  %v689 = vsub.s32 0, %v688
  %v690 = vrot.slane %v685, %v689
  %692 = vmatprep.subr.mxu0 0.0
  %693 = vmatpush1.msra.mxu0 %v684
  %694 = vmatprep.subr.mxu0 0.0
  %695 = vmatpush1.msra.mxu0 %v683
  %696 = vmatprep.subr.mxu0 0.0
  %697 = vmatpush1.msra.mxu0 %v682
  %698 = vmatprep.subr.mxu0 0.0
  %699 = vmatpush1.msra.mxu0 %v681
  %700 = vmatprep.subr.mxu0 0.0
  %701 = vmatpush1.msra.mxu0 %v680
  %702 = vmatprep.subr.mxu0 0.0
  %703 = vmatpush1.msra.mxu0 %v679
  %704 = vmatprep.subr.mxu0 0.0
  %705 = vmatpush1.msra.mxu0 %v678
  %706 = vmatprep.subr.mxu0 0.0
  %707 = vmatpush1.msra.mxu0 %v677
  %708 = vmatprep.subr.mxu0 0.0
  %709 = vmatpush1.msra.mxu0 %v676
  %710 = vmatprep.subr.mxu0 0.0
  %711 = vmatpush1.msra.mxu0 %v675
  %712 = vmatprep.subr.mxu0 0.0
  %713 = vmatpush1.msra.mxu0 %v674
  %714 = vmatprep.subr.mxu0 0.0
  %715 = vmatpush1.msra.mxu0 %v673
  %716 = vmatprep.subr.mxu0 0.0
  %717 = vmatpush1.msra.mxu0 %v672
  %718 = vmatprep.subr.mxu0 0.0
  %719 = vmatpush1.msra.mxu0 %v671
  %720 = vmatprep.subr.mxu0 0.0
  %721 = vmatpush1.msra.mxu0 %v670
  %722 = vmatprep.subr.mxu0 0.0
  %723 = vmatpush1.msra.mxu0 %v669
  %724 = vmatprep.subr.mxu0 0.0
  %725 = vmatpush2.msra.mxu0 0.0
  %726 = vmatprep.subr.mxu0 0.0
  %727 = vmatpush2.msra.mxu0 0.0
  %728 = vmatprep.subr.mxu0 0.0
  %729 = vmatpush2.msra.mxu0 0.0
  %730 = vmatprep.subr.mxu0 0.0
  %731 = vmatpush2.msra.mxu0 0.0
  %732 = vmatprep.subr.mxu0 0.0
  %733 = vmatpush2.msra.mxu0 0.0
  %734 = vmatprep.subr.mxu0 0.0
  %735 = vmatpush2.msra.mxu0 0.0
  %736 = vmatprep.subr.mxu0 0.0
  %737 = vmatpush2.msra.mxu0 0.0
  %738 = vmatprep.subr.mxu0 0.0
  %739 = vmatpush2.msra.mxu0 0.0
  %740 = vmatprep.subr.mxu0 0.0
  %741 = vmatpush2.msra.mxu0 0.0
  %742 = vmatprep.subr.mxu0 0.0
  %743 = vmatpush2.msra.mxu0 0.0
  %744 = vmatprep.subr.mxu0 0.0
  %745 = vmatpush2.msra.mxu0 0.0
  %746 = vmatprep.subr.mxu0 0.0
  %747 = vmatpush2.msra.mxu0 0.0
  %748 = vmatprep.subr.mxu0 0.0
  %749 = vmatpush2.msra.mxu0 0.0
  %750 = vmatprep.subr.mxu0 0.0
  %751 = vmatpush2.msra.mxu0 0.0
  %752 = vmatprep.subr.mxu0 0.0
  %753 = vmatpush2.msra.mxu0 0.0
  %754 = vmatprep.subr.mxu0 0.0
  %755 = vmatpush2.msra.mxu0 0.0
  %756 = vmatprep.mubr.f32.mxu0 0.0
  %757 = vmatmul.mubr.f32.gmra.mxu0 %v637
  %v758 = vpop.f32.mrf.mxu0
  %v759 = vadd.f32 %v690, %v758
  %v760 = vpop.f32.mrf.mxu0
  %761 = vmatprep.mubr.f32.mxu0 0.0
  %762 = vmatmul.mubr.f32.gmra.mxu0 %v638
  %v763 = vpop.f32.mrf.mxu0
  %v764 = vadd.f32 %v690, %v763
  %v765 = vpop.f32.mrf.mxu0
  %766 = vmatprep.mubr.f32.mxu0 0.0
  %767 = vmatmul.mubr.f32.gmra.mxu0 %v639
  %v768 = vpop.f32.mrf.mxu0
  %v769 = vadd.f32 %v690, %v768
  %v770 = vpop.f32.mrf.mxu0
  %771 = vmatprep.mubr.f32.mxu0 0.0
  %772 = vmatmul.mubr.f32.gmra.mxu0 %v640
  %v773 = vpop.f32.mrf.mxu0
  %v774 = vadd.f32 %v690, %v773
  %v775 = vpop.f32.mrf.mxu0
  %776 = vmatprep.mubr.f32.mxu0 0.0
  %777 = vmatmul.mubr.f32.gmra.mxu0 %v641
  %v778 = vpop.f32.mrf.mxu0
  %v779 = vadd.f32 %v690, %v778
  %v780 = vpop.f32.mrf.mxu0
  %781 = vmatprep.mubr.f32.mxu0 0.0
  %782 = vmatmul.mubr.f32.gmra.mxu0 %v642
  %v783 = vpop.f32.mrf.mxu0
  %v784 = vadd.f32 %v690, %v783
  %v785 = vpop.f32.mrf.mxu0
  %786 = vmatprep.mubr.f32.mxu0 0.0
  %787 = vmatmul.mubr.f32.gmra.mxu0 %v643
  %v788 = vpop.f32.mrf.mxu0
  %v789 = vadd.f32 %v690, %v788
  %v790 = vpop.f32.mrf.mxu0
  %791 = vmatprep.mubr.f32.mxu0 0.0
  %792 = vmatmul.mubr.f32.gmra.mxu0 %v644
  %v793 = vpop.f32.mrf.mxu0
  %v794 = vadd.f32 %v690, %v793
  %v795 = vpop.f32.mrf.mxu0
  %796 = vmatprep.mubr.f32.mxu0 0.0
  %797 = vmatmul.mubr.f32.gmra.mxu0 %v645
  %v798 = vpop.f32.mrf.mxu0
  %v799 = vadd.f32 %v690, %v798
  %v800 = vpop.f32.mrf.mxu0
  %801 = vmatprep.mubr.f32.mxu0 0.0
  %802 = vmatmul.mubr.f32.gmra.mxu0 %v646
  %v803 = vpop.f32.mrf.mxu0
  %v804 = vadd.f32 %v690, %v803
  %v805 = vpop.f32.mrf.mxu0
  %806 = vmatprep.mubr.f32.mxu0 0.0
  %807 = vmatmul.mubr.f32.gmra.mxu0 %v647
  %v808 = vpop.f32.mrf.mxu0
  %v809 = vadd.f32 %v690, %v808
  %v810 = vpop.f32.mrf.mxu0
  %811 = vmatprep.mubr.f32.mxu0 0.0
  %812 = vmatmul.mubr.f32.gmra.mxu0 %v648
  %v813 = vpop.f32.mrf.mxu0
  %v814 = vadd.f32 %v690, %v813
  %v815 = vpop.f32.mrf.mxu0
  %816 = vmatprep.mubr.f32.mxu0 0.0
  %817 = vmatmul.mubr.f32.gmra.mxu0 %v649
  %v818 = vpop.f32.mrf.mxu0
  %v819 = vadd.f32 %v690, %v818
  %v820 = vpop.f32.mrf.mxu0
  %821 = vmatprep.mubr.f32.mxu0 0.0
  %822 = vmatmul.mubr.f32.gmra.mxu0 %v650
  %v823 = vpop.f32.mrf.mxu0
  %v824 = vadd.f32 %v690, %v823
  %v825 = vpop.f32.mrf.mxu0
  %826 = vmatprep.mubr.f32.mxu0 0.0
  %827 = vmatmul.mubr.f32.gmra.mxu0 %v651
  %v828 = vpop.f32.mrf.mxu0
  %v829 = vadd.f32 %v690, %v828
  %v830 = vpop.f32.mrf.mxu0
  %831 = vmatprep.mubr.f32.mxu0 0.0
  %832 = vmatmul.mubr.f32.gmra.mxu0 %v652
  %v833 = vpop.f32.mrf.mxu0
  %v834 = vadd.f32 %v690, %v833
  %v835 = vpop.f32.mrf.mxu0
  %836 = vmatprep.mubr.f32.mxu0 0.0
  %837 = vmatmul.mubr.f32.gmra.mxu0 %v653
  %v838 = vpop.f32.mrf.mxu0
  %v839 = vadd.f32 %v690, %v838
  %v840 = vpop.f32.mrf.mxu0
  %841 = vmatprep.mubr.f32.mxu0 0.0
  %842 = vmatmul.mubr.f32.gmra.mxu0 %v654
  %v843 = vpop.f32.mrf.mxu0
  %v844 = vadd.f32 %v690, %v843
  %v845 = vpop.f32.mrf.mxu0
  %846 = vmatprep.mubr.f32.mxu0 0.0
  %847 = vmatmul.mubr.f32.gmra.mxu0 %v655
  %v848 = vpop.f32.mrf.mxu0
  %v849 = vadd.f32 %v690, %v848
  %v850 = vpop.f32.mrf.mxu0
  %851 = vmatprep.mubr.f32.mxu0 0.0
  %852 = vmatmul.mubr.f32.gmra.mxu0 %v656
  %v853 = vpop.f32.mrf.mxu0
  %v854 = vadd.f32 %v690, %v853
  %v855 = vpop.f32.mrf.mxu0
  %856 = vmatprep.mubr.f32.mxu0 0.0
  %857 = vmatmul.mubr.f32.gmra.mxu0 %v657
  %v858 = vpop.f32.mrf.mxu0
  %v859 = vadd.f32 %v690, %v858
  %v860 = vpop.f32.mrf.mxu0
  %861 = vmatprep.mubr.f32.mxu0 0.0
  %862 = vmatmul.mubr.f32.gmra.mxu0 %v658
  %v863 = vpop.f32.mrf.mxu0
  %v864 = vadd.f32 %v690, %v863
  %v865 = vpop.f32.mrf.mxu0
  %866 = vmatprep.mubr.f32.mxu0 0.0
  %867 = vmatmul.mubr.f32.gmra.mxu0 %v659
  %v868 = vpop.f32.mrf.mxu0
  %v869 = vadd.f32 %v690, %v868
  %v870 = vpop.f32.mrf.mxu0
  %871 = vmatprep.mubr.f32.mxu0 0.0
  %872 = vmatmul.mubr.f32.gmra.mxu0 %v660
  %v873 = vpop.f32.mrf.mxu0
  %v874 = vadd.f32 %v690, %v873
  %v875 = vpop.f32.mrf.mxu0
  %876 = vmatprep.mubr.f32.mxu0 0.0
  %877 = vmatmul.mubr.f32.gmra.mxu0 %v661
  %v878 = vpop.f32.mrf.mxu0
  %v879 = vadd.f32 %v690, %v878
  %v880 = vpop.f32.mrf.mxu0
  %881 = vmatprep.mubr.f32.mxu0 0.0
  %882 = vmatmul.mubr.f32.gmra.mxu0 %v662
  %v883 = vpop.f32.mrf.mxu0
  %v884 = vadd.f32 %v690, %v883
  %v885 = vpop.f32.mrf.mxu0
  %886 = vmatprep.mubr.f32.mxu0 0.0
  %887 = vmatmul.mubr.f32.gmra.mxu0 %v663
  %v888 = vpop.f32.mrf.mxu0
  %v889 = vadd.f32 %v690, %v888
  %v890 = vpop.f32.mrf.mxu0
  %891 = vmatprep.mubr.f32.mxu0 0.0
  %892 = vmatmul.mubr.f32.gmra.mxu0 %v664
  %v893 = vpop.f32.mrf.mxu0
  %v894 = vadd.f32 %v690, %v893
  %v895 = vpop.f32.mrf.mxu0
  %896 = vmatprep.mubr.f32.mxu0 0.0
  %897 = vmatmul.mubr.f32.gmra.mxu0 %v665
  %v898 = vpop.f32.mrf.mxu0
  %v899 = vadd.f32 %v690, %v898
  %v900 = vpop.f32.mrf.mxu0
  %901 = vmatprep.mubr.f32.mxu0 0.0
  %902 = vmatmul.mubr.f32.gmra.mxu0 %v666
  %v903 = vpop.f32.mrf.mxu0
  %v904 = vadd.f32 %v690, %v903
  %v905 = vpop.f32.mrf.mxu0
  %906 = vmatprep.mubr.f32.mxu0 0.0
  %907 = vmatmul.mubr.f32.gmra.mxu0 %v667
  %v908 = vpop.f32.mrf.mxu0
  %v909 = vadd.f32 %v690, %v908
  %v910 = vpop.f32.mrf.mxu0
  %911 = vmatprep.mubr.f32.mxu0 0.0
  %912 = vmatmul.mubr.f32.gmra.mxu0 %v668
  %v913 = vpop.f32.mrf.mxu0
  %v914 = vadd.f32 %v690, %v913
  %v915 = vpop.f32.mrf.mxu0
  %916 = vdwg.mxu0
  %917 = vst [vmem:[%s7] sm:$0xff] %v759
  %918 = vst [vmem:[%s7 + $0x8] sm:$0xff] %v764
  %919 = vst [vmem:[%s7 + $0x10] sm:$0xff] %v769
  %920 = vst [vmem:[%s7 + $0x18] sm:$0xff] %v774
  %921 = vst [vmem:[%s7 + $0x20] sm:$0xff] %v779
  %922 = vst [vmem:[%s7 + $0x28] sm:$0xff] %v784
  %923 = vst [vmem:[%s7 + $0x30] sm:$0xff] %v789
  %924 = vst [vmem:[%s7 + $0x38] sm:$0xff] %v794
  %925 = vst [vmem:[%s7 + $0x40] sm:$0xff] %v799
  %926 = vst [vmem:[%s7 + $0x48] sm:$0xff] %v804
  %927 = vst [vmem:[%s7 + $0x50] sm:$0xff] %v809
  %928 = vst [vmem:[%s7 + $0x58] sm:$0xff] %v814
  %929 = vst [vmem:[%s7 + $0x60] sm:$0xff] %v819
  %930 = vst [vmem:[%s7 + $0x68] sm:$0xff] %v824
  %931 = vst [vmem:[%s7 + $0x70] sm:$0xff] %v829
  %932 = vst [vmem:[%s7 + $0x78] sm:$0xff] %v834
  %933 = vst [vmem:[%s7 + $0x80] sm:$0xff] %v839
  %934 = vst [vmem:[%s7 + $0x88] sm:$0xff] %v844
  %935 = vst [vmem:[%s7 + $0x90] sm:$0xff] %v849
  %936 = vst [vmem:[%s7 + $0x98] sm:$0xff] %v854
  %937 = vst [vmem:[%s7 + $0xa0] sm:$0xff] %v859
  %938 = vst [vmem:[%s7 + $0xa8] sm:$0xff] %v864
  %939 = vst [vmem:[%s7 + $0xb0] sm:$0xff] %v869
  %940 = vst [vmem:[%s7 + $0xb8] sm:$0xff] %v874
  %941 = vst [vmem:[%s7 + $0xc0] sm:$0xff] %v879
  %942 = vst [vmem:[%s7 + $0xc8] sm:$0xff] %v884
  %943 = vst [vmem:[%s7 + $0xd0] sm:$0xff] %v889
  %944 = vst [vmem:[%s7 + $0xd8] sm:$0xff] %v894
  %945 = vst [vmem:[%s7 + $0xe0] sm:$0xff] %v899
  %946 = vst [vmem:[%s7 + $0xe8] sm:$0xff] %v904
  %947 = vst [vmem:[%s7 + $0xf0] sm:$0xff] %v909
  %948 = vst [vmem:[%s7 + $0xf8] sm:$0xff] %v914
  // Predicated region
  $region30: #{_lambda_.1} parent=0 // pred_check
    _
  $region31: #{_lambda_.1} parent=0 // pred_check_branch
    %950 = sbr.rel (0) target = $region33
  $region32: #{_lambda_.1} parent=0 // pred_region
    _
  $region33: #{_lambda_.1} parent=0 // pred_fallthru
    _
  // Predicated region
  $region34: #{_lambda_.1} parent=0 // pred_check
    _
  $region35: #{_lambda_.1} parent=0 // pred_check_branch
    %952 = sbr.rel (0) target = $region37
  $region36: #{_lambda_.1} parent=0 // pred_region
    _
  $region37: #{_lambda_.1} parent=0 // pred_fallthru
    _

</llo_original>
